<compile_context>
chip_gen: v5e
topology: v5e:2x2
jax: 0.10.0
libtpu: 0.0.40
codegen_flags: <defaults>
</compile_context>

<pallas_src>
import functools

import jax
import jax.numpy as jnp
from jax import lax
from jax.experimental import pallas as pl
from jax.experimental.pallas import tpu as pltpu


def _round_up(a: int, b: int) -> int:
    return ((a + b - 1) // b) * b


def _proj_kernel(x_ref, w_ref, b_ref, o_ref):
    """o = x @ w + b, accumulated in f32 on the MXU.

    x_ref: (TM, E)   token tile
    w_ref: (E, Dp)   full (padded) weight, already transposed to (in, out)
    b_ref: (1, Dp)   bias row (f32)
    o_ref: (TM, Dp)
    """
    acc = lax.dot_general(
        x_ref[...], w_ref[...],
        dimension_numbers=(((1,), (0,)), ((), ())),  # natural (M,K)x(K,N)
        preferred_element_type=jnp.float32)
    o_ref[...] = (acc + b_ref[...]).astype(o_ref.dtype)


def _linear_pallas(x_flat, weight, bias, *, tm=512, out_dtype=None):
    """y = x_flat @ weight.T + bias; weight given in PyTorch (out, in) layout."""
    M, E = x_flat.shape
    D = weight.shape[0]
    out_dtype = out_dtype or x_flat.dtype

    # Lane-dense output: pad D up to a multiple of 128 (toy D=64 -> 128;
    # real ViT D=768 is already aligned, so this is a no-op there).
    Dp = _round_up(D, 128)

    # One-time (E, Dp) transpose in the wrapper (a single tiny HBM pass,
    # amortized over all row tiles); the kernel never relayouts the RHS.
    w_t = weight.T
    if Dp != D:
        w_t = jnp.pad(w_t, ((0, 0), (0, Dp - D)))
        bias = jnp.pad(bias, (0, Dp - D))
    bias2d = bias.astype(jnp.float32).reshape(1, Dp)

    # Sublane multiple for the compute dtype: 8 (f32), 16 (bf16), 32 (int8).
    x_itemsize = jnp.dtype(x_flat.dtype).itemsize
    sub = max(8, 32 // x_itemsize)

    # Row tile: as large as the budget allows, but always >= 2 tiles when M
    # permits so the "parallel" row grid shards across both v7x TensorCores.
    if M <= sub:
        tm_eff = sub
    else:
        half = max(sub, _round_up(-(-M // 2), sub))
        tm_eff = min(_round_up(tm, sub), half)

    w_itemsize = jnp.dtype(w_t.dtype).itemsize
    o_itemsize = jnp.dtype(out_dtype).itemsize

    def _vmem_est(t):
        return (2 * t * E * x_itemsize        # x tile, double-buffered
                + 2 * t * Dp * o_itemsize     # y tile, double-buffered
                + 2 * Dp * E * w_itemsize     # resident weight (2 bufs by default)
                + 2 * Dp * 4)                 # bias

    budget = 40 << 20                         # fits v7x 64 MiB physical VMEM
    while _vmem_est(tm_eff) > budget and tm_eff > sub:
        tm_eff = max(sub, _round_up(tm_eff // 2, sub))
    vmem_limit = max(4 << 20,
                     min(int(_vmem_est(tm_eff) * 1.3) + (2 << 20), 64 << 20))

    Mp = _round_up(M, tm_eff)
    if Mp != M:
        x_flat = jnp.pad(x_flat, ((0, Mp - M), (0, 0)))
    grid = (Mp // tm_eff,)

    y = pl.pallas_call(
        _proj_kernel,
        out_shape=jax.ShapeDtypeStruct((Mp, Dp), out_dtype),
        grid_spec=pltpu.PrefetchScalarGridSpec(
            num_scalar_prefetch=0,
            grid=grid,
            in_specs=[
                pl.BlockSpec((tm_eff, E), lambda i: (i, 0)),
                # Constant index map -> Pallas keeps the weight resident in
                # VMEM across grid steps (no per-step re-DMA).
                pl.BlockSpec((E, Dp), lambda i: (0, 0)),
                pl.BlockSpec((1, Dp), lambda i: (0, 0)),
            ],
            out_specs=pl.BlockSpec((tm_eff, Dp), lambda i: (i, 0)),
        ),
        compiler_params=pltpu.CompilerParams(
            # Row tiles are independent -> megacore sharding on v7x.
            dimension_semantics=("parallel",),
            vmem_limit_bytes=vmem_limit,
        ),
    )(x_flat, w_t, bias2d)

    return y[:M, :D]


def patches2im(x, weight, bias, *, im_size, in_chs, patch_size, tm=512,
               compute_dtype=None):
    """JAX/Pallas equivalent of Patches2Im.forward.

    x:      (B, N, E)           token embeddings, N = (im_size//patch_size)**2
    weight: (C*P*P, E)          nn.Linear weight (PyTorch convention: out, in)
    bias:   (C*P*P,)            nn.Linear bias
    returns (B, C, im_size, im_size)  -- NCHW, matching PyTorch
    """
    B, N, E = x.shape
    h = im_size // patch_size
    w = im_size // patch_size
    s1 = s2 = patch_size
    c = in_chs
    D = c * s1 * s2
    assert N == h * w and weight.shape == (D, E) and bias.shape == (D,)

    out_dtype = x.dtype
    if compute_dtype is not None:
        # bf16 inputs on v5e/v6e/v7x roughly double MXU throughput and halve
        # input HBM/VMEM bytes; accumulation stays f32 inside the kernel.
        x = x.astype(compute_dtype)
        weight = weight.astype(compute_dtype)

    # ---- hot path: linear projection on the MXU ----
    x_flat = x.reshape(B * N, E)
    y_flat = _linear_pallas(x_flat, weight, bias, tm=tm, out_dtype=out_dtype)

    # ---- glue: rearrange 'b (h w) (s1 s2 c) -> b c (h s1) (w s2)' ----
    # TODO(synk): fuse this rearrange into the kernel output path (see header).
    y = y_flat.reshape(B, h, w, s1, s2, c)
    y = jnp.transpose(y, (0, 5, 1, 3, 2, 4))          # (B, c, h, s1, w, s2)
    y = y.reshape(B, c, h * s1, w * s2)               # (B, C, H*P, W*P)
    return y


if __name__ == "__main__":
    # Small shapes consistent with the module:
    #   im_size=16, patch_size=4 -> h=w=4, N=16 tokens
    #   in_chs=4, emb_size=32 -> projection: 32 -> 4*4*4 = 64
    B, im_size, in_chs, patch_size, emb_size = 2, 16, 4, 4, 32
    N = (im_size // patch_size) ** 2
    D = in_chs * patch_size * patch_size

    key = jax.random.PRNGKey(0)
    kx, kw, kb = jax.random.split(key, 3)
    x = jax.random.normal(kx, (B, N, emb_size), dtype=jnp.float32)
    # Deterministic nn.Linear-style init: U(-1/sqrt(E), 1/sqrt(E))
    bound = 1.0 / (emb_size ** 0.5)
    weight = jax.random.uniform(kw, (D, emb_size), jnp.float32, -bound, bound)
    bias = jax.random.uniform(kb, (D,), jnp.float32, -bound, bound)

    fn = jax.jit(functools.partial(
        patches2im, im_size=im_size, in_chs=in_chs, patch_size=patch_size))
    out = jax.block_until_ready(fn(x, weight, bias))

    # Reference check (plain JAX) for the exact PyTorch semantics.
    ref = x @ weight.T + bias
    ref = ref.reshape(B, im_size // patch_size, im_size // patch_size,
                      patch_size, patch_size, in_chs)
    ref = jnp.transpose(ref, (0, 5, 1, 3, 2, 4)).reshape(
        B, in_chs, im_size, im_size)
    assert out.shape == (B, in_chs, im_size, im_size)
    assert jnp.allclose(out, ref, atol=2e-5, rtol=1e-5)

    print("KERNEL_OK")
</pallas_src>

<mosaic_0001>
module attributes {stable_mosaic.version = 11 : i64} {
  func.func @_proj_kernel(%arg0: i32, %arg1: memref<16x32xf32, #tpu.memory_space<vmem>>, %arg2: memref<32x128xf32, #tpu.memory_space<vmem>>, %arg3: memref<1x128xf32, #tpu.memory_space<vmem>>, %arg4: memref<16x128xf32, #tpu.memory_space<vmem>>) attributes {dimension_semantics = [#tpu.dimension_semantics<parallel>], iteration_bounds = array<i64: 2>, scalar_prefetch = 0 : i64, scratch_operands = 0 : i64, tpu.core_type = #tpu.core_type<tc>, window_params = [{transform_indices = @transform_0, window_bounds = array<i64: 16, 32>}, {pipeline_mode = #tpu.pipeline_mode<synchronous>, transform_indices = @transform_1, window_bounds = array<i64: 32, 128>}, {pipeline_mode = #tpu.pipeline_mode<synchronous>, transform_indices = @transform_2, window_bounds = array<i64: 1, 128>}, {transform_indices = @transform_3, window_bounds = array<i64: 16, 128>}]} {
    %c0 = arith.constant 0 : index
    %c0_0 = arith.constant 0 : index
    %0 = vector.load %arg1[%c0, %c0_0] : memref<16x32xf32, #tpu.memory_space<vmem>>, vector<16x32xf32>
    %c0_1 = arith.constant 0 : index
    %c0_2 = arith.constant 0 : index
    %1 = vector.load %arg2[%c0_1, %c0_2] : memref<32x128xf32, #tpu.memory_space<vmem>>, vector<32x128xf32>
    %cst = arith.constant dense<0.000000e+00> : vector<16x128xf32>
    %2 = tpu.matmul %0, %1, %cst {dimension_numbers = #tpu.dot_dimension_numbers<[1], [0], [0], [1], [0, 0, 1, 1], [], []>} : vector<16x32xf32>, vector<32x128xf32>, vector<16x128xf32> -> vector<16x128xf32>
    %c0_3 = arith.constant 0 : index
    %c0_4 = arith.constant 0 : index
    %3 = vector.load %arg3[%c0_3, %c0_4] : memref<1x128xf32, #tpu.memory_space<vmem>>, vector<1x128xf32>
    %4 = vector.broadcast %3 : vector<1x128xf32> to vector<16x128xf32>
    %5 = arith.addf %2, %4 : vector<16x128xf32>
    %c0_5 = arith.constant 0 : index
    %c0_6 = arith.constant 0 : index
    %6 = vector.load %arg4[%c0_5, %c0_6] : memref<16x128xf32, #tpu.memory_space<vmem>>, vector<16x128xf32>
    tpu.vector_store %arg4[%c0_5, %c0_6], %5 {strides = array<i32>} : memref<16x128xf32, #tpu.memory_space<vmem>>, vector<16x128xf32>,
    return
  }
  func.func @transform_0(%arg0: i32) -> (i32, i32) {
    %c0_i32 = arith.constant 0 : i32
    %c0_i32_0 = arith.constant 0 : i32
    return %arg0, %c0_i32 : i32, i32
  }
  func.func @transform_1(%arg0: i32) -> (i32, i32) {
    %c0_i32 = arith.constant 0 : i32
    %c0_i32_0 = arith.constant 0 : i32
    %c0_i32_1 = arith.constant 0 : i32
    return %c0_i32, %c0_i32_0 : i32, i32
  }
  func.func @transform_2(%arg0: i32) -> (i32, i32) {
    %c0_i32 = arith.constant 0 : i32
    %c0_i32_0 = arith.constant 0 : i32
    %c0_i32_1 = arith.constant 0 : i32
    return %c0_i32, %c0_i32_0 : i32, i32
  }
  func.func @transform_3(%arg0: i32) -> (i32, i32) {
    %c0_i32 = arith.constant 0 : i32
    %c0_i32_0 = arith.constant 0 : i32
    return %arg0, %c0_i32 : i32, i32
  }
}

</mosaic_0001>

<llo_original>
// kernel: patches2im.1
$region0: #{patches2im.1}
  #allocation0 [shape = 'u32[]', space=smem, size = 0x4, offset = 0x4, fixed_abs, tag = 'smem constant byte address 0x4 - core index']
  #allocation1 [shape = 'u32[72,128]{1,0:T(1,128)}', space=vmem, size = 0x9000, scoped, tag = 'internal scratch']
  %s0 = inlined_call_operand.vmem [shape: f32[32,32], index: 0, kind: input, shape index: {}]
  %s1 = inlined_call_operand.vmem [shape: f32[32,128], index: 1, kind: input, shape index: {}]
  %s2 = inlined_call_operand.vmem [shape: f32[1,128], index: 2, kind: input, shape index: {}]
  %s3 = inlined_call_operand.vmem [shape: f32[32,128], index: 3, kind: output, shape index: {}]
  %s4 = sld [smem:[#allocation0]]
  $region45: #{patches2im.1} parent=0
    _
  %s6 = ssub.s32 1, %s4
  %s7 = scalar_select 0, %s6, %s4
  loop: start=0, step=1, limit=4
  $region2: #{patches2im.1} parent=0 // loop_pre_header
    _
  $region3: #{patches2im.1} parent=0 // loop_header
    %s9 = sphi 0, %s13
    %p10 = scmp.ge.s32.totalorder %s9, 4
    %s19 = sphi 0, %s21
    %s22 = sphi 0, %s19
    %s23 = sphi 0, %s22
    %s39 = sphi 0, %s23
    %s43 = sphi 0, %s43
    %s45 = sphi 0, %s43
    %s46 = sphi 0, %s45
    %s60 = sphi 0, %s46
    %s64 = sphi 0, %s64
    %s66 = sphi 0, %s64
    %s67 = sphi 0, %s66
    %s81 = sphi 0, %s67
    %s87 = sphi 0, %s89
    %s90 = sphi 0, %s87
    %s91 = sphi 0, %s90
    %s107 = sphi 0, %s91
  $region4: #{patches2im.1} parent=0 // loop_header_branch
    %12 = sbr.rel (%p10) target = $region8
  $region5: #{patches2im.1} parent=0 // loop_body
    %s14 = ssub.s32 %s9, 1
    %s15 = ssub.s32 %s9, 2
    %s16 = sadd.s32 %s9, 1
    %s17 = ssub.s32 %s9, %s16
    %p18 = scmp.eq.s32.totalorder %s17, 0
    %s20 = sadd.s32 %s19, 1
    %s21 = scalar_select %p18, %s19, %s20
    %p24 = pneg %p18
    %p25 = scmp.eq.s32.totalorder %s9, 1
    %p26 = por %p24, %p25
    %p27 = scmp.ne.s32.totalorder %s19, %s22
    %p28 = scmp.eq.s32.totalorder %s9, 0
    %p29 = por %p27, %p28
    %p30 = scmp.ne.s32.totalorder %s19, %s22
    %p31 = scmp.eq.s32.totalorder %s14, 1
    %p32 = por %p30, %p31
    %p33 = scmp.ne.s32.totalorder %s22, %s23
    %p34 = scmp.eq.s32.totalorder %s14, 0
    %p35 = por %p33, %p34
    %p36 = scmp.ne.s32.totalorder %s22, %s23
    %p37 = scmp.eq.s32.totalorder %s15, 1
    %p38 = por %p36, %p37
    %p40 = scmp.ne.s32.totalorder %s23, %s39
    %p41 = scmp.eq.s32.totalorder %s15, 0
    %p42 = por %p40, %p41
    %s44 = sadd.s32 %s43, 1
    %p47 = scmp.eq.s32.totalorder %s9, 1
    %p48 = scmp.ne.s32.totalorder %s43, %s45
    %p49 = scmp.eq.s32.totalorder %s9, 0
    %p50 = por %p48, %p49
    %p51 = scmp.ne.s32.totalorder %s43, %s45
    %p52 = scmp.eq.s32.totalorder %s14, 1
    %p53 = por %p51, %p52
    %p54 = scmp.ne.s32.totalorder %s45, %s46
    %p55 = scmp.eq.s32.totalorder %s14, 0
    %p56 = por %p54, %p55
    %p57 = scmp.ne.s32.totalorder %s45, %s46
    %p58 = scmp.eq.s32.totalorder %s15, 1
    %p59 = por %p57, %p58
    %p61 = scmp.ne.s32.totalorder %s46, %s60
    %p62 = scmp.eq.s32.totalorder %s15, 0
    %p63 = por %p61, %p62
    %s65 = sadd.s32 %s64, 1
    %p68 = scmp.eq.s32.totalorder %s9, 1
    %p69 = scmp.ne.s32.totalorder %s64, %s66
    %p70 = scmp.eq.s32.totalorder %s9, 0
    %p71 = por %p69, %p70
    %p72 = scmp.ne.s32.totalorder %s64, %s66
    %p73 = scmp.eq.s32.totalorder %s14, 1
    %p74 = por %p72, %p73
    %p75 = scmp.ne.s32.totalorder %s66, %s67
    %p76 = scmp.eq.s32.totalorder %s14, 0
    %p77 = por %p75, %p76
    %p78 = scmp.ne.s32.totalorder %s66, %s67
    %p79 = scmp.eq.s32.totalorder %s15, 1
    %p80 = por %p78, %p79
    %p82 = scmp.ne.s32.totalorder %s67, %s81
    %p83 = scmp.eq.s32.totalorder %s15, 0
    %p84 = por %p82, %p83
    %s85 = ssub.s32 %s9, %s16
    %p86 = scmp.eq.s32.totalorder %s85, 0
    %s88 = sadd.s32 %s87, 1
    %s89 = scalar_select %p86, %s87, %s88
    %p92 = pneg %p86
    %p93 = scmp.eq.s32.totalorder %s9, 1
    %p94 = por %p92, %p93
    %p95 = scmp.ne.s32.totalorder %s87, %s90
    %p96 = scmp.eq.s32.totalorder %s9, 0
    %p97 = por %p95, %p96
    %p98 = scmp.ne.s32.totalorder %s87, %s90
    %p99 = scmp.eq.s32.totalorder %s14, 1
    %p100 = por %p98, %p99
    %p101 = scmp.ne.s32.totalorder %s90, %s91
    %p102 = scmp.eq.s32.totalorder %s14, 0
    %p103 = por %p101, %p102
    %p104 = scmp.ne.s32.totalorder %s90, %s91
    %p105 = scmp.eq.s32.totalorder %s15, 1
    %p106 = por %p104, %p105
    %p108 = scmp.ne.s32.totalorder %s91, %s107
    %p109 = scmp.eq.s32.totalorder %s15, 0
    %p110 = por %p108, %p109
    %p111 = scmp.le.s32.totalorder 1, %s9
    %p112 = scmp.lt.s32.totalorder %s9, 3
    %p113 = pnand %p111, %p112
    %p114 = pneg %p113
    // Predicated region
    $region9: #{patches2im.1} parent=5 // pred_check
      _
    $region10: #{patches2im.1} parent=5 // pred_check_branch
      %116 = sbr.rel (%p113) target = $region12
    $region11: #{patches2im.1} parent=5 // pred_region
      %s117 = ssub.s32 %s9, 1
      // Predicated region
      $region13: #{patches2im.1} parent=11 // pred_check
        %p118 = pneg %p56
      $region14: #{patches2im.1} parent=11 // pred_check_branch
        %120 = sbr.rel (%p118) target = $region16
      $region15: #{patches2im.1} parent=11 // pred_region
        _
      $region16: #{patches2im.1} parent=11 // pred_fallthru
        _
      // Predicated region
      $region17: #{patches2im.1} parent=11 // pred_check
        %p121 = pneg %p77
      $region18: #{patches2im.1} parent=11 // pred_check_branch
        %123 = sbr.rel (%p121) target = $region20
      $region19: #{patches2im.1} parent=11 // pred_region
        _
      $region20: #{patches2im.1} parent=11 // pred_fallthru
        _
    $region12: #{patches2im.1} parent=5 // pred_fallthru
      _
    %p124 = scmp.lt.s32.totalorder %s9, 2
    // Predicated region
    $region21: #{patches2im.1} parent=5 // pred_check
      %p125 = pneg %p124
    $region22: #{patches2im.1} parent=5 // pred_check_branch
      %127 = sbr.rel (%p125) target = $region24
    $region23: #{patches2im.1} parent=5 // pred_region
      // Predicated region
      $region25: #{patches2im.1} parent=23 // pred_check
        %p128 = pneg %p29
      $region26: #{patches2im.1} parent=23 // pred_check_branch
        %130 = sbr.rel (%p128) target = $region28
      $region27: #{patches2im.1} parent=23 // pred_region
        %s131 = smul.u32 2, %s9
        %p132 = scmp.lt.s32.totalorder %s131, 3
        %s133 = scalar_select %p132, %s131, 3
        %s134 = smul.addr %s133, 8
        %s135 = scalar_lea.vmem %s0, %s134
        %s136 = smul.u32 2, %s9
      $region28: #{patches2im.1} parent=23 // pred_fallthru
        _
    $region24: #{patches2im.1} parent=5 // pred_fallthru
      _
    %p137 = scmp.le.s32.totalorder 1, %s9
    %p138 = scmp.lt.s32.totalorder %s9, 3
    %p139 = pnand %p137, %p138
    %p140 = pneg %p139
    // Predicated region
    $region29: #{patches2im.1} parent=5 // pred_check
      _
    $region30: #{patches2im.1} parent=5 // pred_check_branch
      %142 = sbr.rel (%p139) target = $region32
    $region31: #{patches2im.1} parent=5 // pred_region
      %s143 = ssub.s32 %s9, 1
      %s144 = smul.u32 2, %s14
      %p145 = scmp.lt.s32.totalorder %s144, 3
      %s146 = scalar_select %p145, %s144, 3
      %s147 = smul.addr %s146, 8
      %s148 = scalar_lea.vmem %s0, %s147
      %p149 = pneg %p35
      %p150 = pneg %p32
      %p151 = pneg %p56
      %p152 = pneg %p53
      %p153 = pneg %p77
      %p154 = pneg %p74
      %p155 = pneg %p103
      %p156 = pneg %p100
      %s157 = smul.u32 2, %s14
      %p158 = scmp.lt.s32.totalorder %s157, 3
      %s159 = scalar_select %p158, %s157, 3
      %s160 = smul.addr %s159, 8
      %s161 = scalar_lea.vmem %s3, %s160
      %s162 = smul.u32 2, %s14
      %p163 = scmp.lt.s32.totalorder %s162, 3
      %s164 = scalar_select %p163, %s162, 3
      %s165 = smul.addr %s164, 8
      %s166 = scalar_lea.vmem %s0, %s165
      %s167 = smul.u32 2, %s14
      %s168 = smul.u32 2, %s14
      %p169 = scmp.lt.s32.totalorder %s168, 3
      %s170 = scalar_select %p169, %s168, 3
      %s171 = smul.addr %s170, 8
      %s172 = scalar_lea.vmem %s3, %s171
      %s173 = smul.u32 2, %s14
      %v174 = vld [vmem:[%s166] sm:$0xff]
      %v175 = vld [vmem:[%s166 + $0x8] sm:$0xff]
      %v176 = vld [vmem:[%s1] sm:$0xff]
      %v177 = vld [vmem:[%s1 + $0x8] sm:$0xff]
      %v178 = vld [vmem:[%s1 + $0x10] sm:$0xff]
      %v179 = vld [vmem:[%s1 + $0x18] sm:$0xff]
      %v180 = vld [vmem:[%s2] sm:$0x1]
      %v182 = vperm.slane %v180, 0
      %vm184 = vcmask 261120
      %v186 = vsel %vm184, %v174, 0
      %v189 = vsel %vm184, %v175, 0
      %191 = vmatpush.msra.mxu0 0.0
      %192 = vmatpush.msra.mxu0 0.0
      %193 = vmatpush.msra.mxu0 0.0
      %194 = vmatpush.msra.mxu0 0.0
      %195 = vmatpush.msra.mxu0 0.0
      %196 = vmatpush.msra.mxu0 0.0
      %197 = vmatpush.msra.mxu0 0.0
      %198 = vmatpush.msra.mxu0 0.0
      %199 = vmatpush.msra.mxu0 0.0
      %200 = vmatpush.msra.mxu0 0.0
      %201 = vmatpush.msra.mxu0 0.0
      %202 = vmatpush.msra.mxu0 0.0
      %203 = vmatpush.msra.mxu0 %v179
      %204 = vmatpush.msra.mxu0 %v178
      %205 = vmatpush.msra.mxu0 %v177
      %206 = vmatpush.msra.mxu0 %v176
      %207 = vmatmul.f32.gmra.mxu0 %v186
      %v208 = vpop.f32.mrf.mxu0
      %v209 = vadd.f32 %v182, %v208
      %210 = vmatmul.f32.gmra.mxu0 %v189
      %v211 = vpop.f32.mrf.mxu0
      %v212 = vadd.f32 %v182, %v211
      %213 = vdwg.mxu0
      %214 = vst [vmem:[%s172] sm:$0xff] %v209
      %215 = vst [vmem:[%s172 + $0x8] sm:$0xff] %v212
      %s216 = smul.u32 2, %s14
      %p217 = scmp.lt.s32.totalorder %s216, 3
      %s218 = scalar_select %p217, %s216, 3
      %s219 = smul.addr %s218, 8
      %s220 = scalar_lea.vmem %s3, %s219
      // Predicated region
      $region33: #{patches2im.1} parent=31 // pred_check
        %p221 = pneg %p100
      $region34: #{patches2im.1} parent=31 // pred_check_branch
        %223 = sbr.rel (%p221) target = $region36
      $region35: #{patches2im.1} parent=31 // pred_region
        %s224 = smul.u32 2, %s14
      $region36: #{patches2im.1} parent=31 // pred_fallthru
        _
    $region32: #{patches2im.1} parent=5 // pred_fallthru
      _
    %p225 = scmp.le.s32.totalorder 2, %s9
    // Predicated region
    $region37: #{patches2im.1} parent=5 // pred_check
      %p226 = pneg %p225
    $region38: #{patches2im.1} parent=5 // pred_check_branch
      %228 = sbr.rel (%p226) target = $region40
    $region39: #{patches2im.1} parent=5 // pred_region
      %s229 = ssub.s32 %s9, 2
      // Predicated region
      $region41: #{patches2im.1} parent=39 // pred_check
        %p230 = pneg %p106
      $region42: #{patches2im.1} parent=39 // pred_check_branch
        %232 = sbr.rel (%p230) target = $region44
      $region43: #{patches2im.1} parent=39 // pred_region
        %s233 = smul.u32 2, %s15
        %p234 = scmp.lt.s32.totalorder %s233, 3
        %s235 = scalar_select %p234, %s233, 3
        %s236 = smul.addr %s235, 8
        %s237 = scalar_lea.vmem %s3, %s236
      $region44: #{patches2im.1} parent=39 // pred_fallthru
        _
    $region40: #{patches2im.1} parent=5 // pred_fallthru
      _
  $region6: #{patches2im.1} parent=0 // loop_footer
    %s13 = sadd.s32 1, %s9
  $region7: #{patches2im.1} parent=0 // loop_footer_branch
    %8 = sbr.rel target = $region3
  $region8: #{patches2im.1} parent=0 // loop_exit
    _

</llo_original>
